<compile_context>
chip_gen: v6e
topology: v6e:2x2x1
jax: 0.10.0
libtpu: 0.0.40
codegen_flags: <defaults>
</compile_context>

<pallas_src>
import math

import jax
import jax.numpy as jnp
from jax.experimental import pallas as pl
from jax.experimental.pallas import tpu as pltpu

_LANES = 128


def _drop_path_tile_kernel(scale_ref, x_ref, o_ref):
    """Dense per-sample tile. x_ref/o_ref: (tile_r, 128); scale_ref: (B,) f32 in SMEM."""
    b = pl.program_id(0)                        # which sample this tile belongs to
    s = scale_ref[b].astype(x_ref.dtype)        # 0.0 (dropped) or 1/keep_prob (kept)
    o_ref[...] = (x_ref[...] * s).astype(o_ref.dtype)


def _drop_path_bcast_kernel(scale_ref, x_ref, o_ref):
    """Fallback path. x_ref/o_ref: (B, tile_f); scale_ref: (B, 1) f32 in VMEM."""
    o_ref[...] = (x_ref[...] * scale_ref[...].astype(x_ref.dtype)).astype(o_ref.dtype)


def _keep_scale(rng_key, batch, keep_prob):
    """(B,) f32: floor(keep_prob + U) / keep_prob, one entry per sample."""
    u = jax.random.uniform(rng_key, (batch,), dtype=jnp.float32)
    return jnp.floor(keep_prob + u) * (1.0 / keep_prob)


def drop_path(x, drop_prob: float = 0.1, *, training: bool = False,
              rng_key=None, seed: int = 0):
    """Stochastic-depth forward matching the PyTorch `drop_path` function.

    Pass a fresh `rng_key` (or a distinct `seed`) per layer / step so different
    DropPath instances do not drop identical samples.
    """
    if drop_prob == 0.0 or not training:
        return x                                   # identity path, like PyTorch
    keep_prob = 1.0 - float(drop_prob)
    if rng_key is None:
        rng_key = jax.random.PRNGKey(seed)

    B = x.shape[0]
    F = math.prod(x.shape[1:])
    itemsize = x.dtype.itemsize
    scale = _keep_scale(rng_key, B, keep_prob)     # (B,) f32, computed once

    # In-place update only pays off when the caller donates x under jit; skip
    # the alias on non-TPU (interpret) backends.
    aliases = {1: 0} if jax.default_backend() == "tpu" else {}
    vmem_limit = 32 * 1024 * 1024                  # safe on v5e/v6e/v7x

    if F % _LANES == 0 and F >= _LANES:
        # Dense per-sample layout: (B, R, 128) -> every block is a full
        # (tile_r, 128) vreg-aligned slab regardless of how small B is.
        R = F // _LANES
        x3 = x.reshape(B, R, _LANES)
        max_rows = max(8, ((1 << 20) // (_LANES * itemsize)) // 8 * 8)  # ~1 MiB/block
        tile_r = min(R, max_rows)                  # full dim or a multiple of 8
        grid = (B, pl.cdiv(R, tile_r))
        out = pl.pallas_call(
            _drop_path_tile_kernel,
            out_shape=jax.ShapeDtypeStruct((B, R, _LANES), x.dtype),
            grid=grid,
            in_specs=[
                pl.BlockSpec(memory_space=pltpu.MemorySpace.SMEM),  # scale (B,)
                pl.BlockSpec((None, tile_r, _LANES), lambda b, r: (b, r, 0)),
            ],
            out_specs=pl.BlockSpec((None, tile_r, _LANES), lambda b, r: (b, r, 0)),
            input_output_aliases=aliases,
            compiler_params=pltpu.CompilerParams(
                dimension_semantics=("parallel", "parallel"),
                vmem_limit_bytes=vmem_limit),
        )(scale, x3)
        return out.reshape(x.shape)

    # Fallback for feature counts not divisible by 128: whole batch per block,
    # tiled along the lane-dense feature axis.
    # TODO(synk): for tiny batches this only fills B of 8 sublanes per vreg;
    # padding F up to a multiple of 128 would route through the dense path.
    x2 = x.reshape(B, F)
    scale2 = scale.reshape(B, 1)
    if F < _LANES:
        tile_f = F
    else:
        tile_f = min(F, max(_LANES,
                            ((1 << 20) // max(B * itemsize, 1)) // _LANES * _LANES))
    grid = (pl.cdiv(F, tile_f),)
    out = pl.pallas_call(
        _drop_path_bcast_kernel,
        out_shape=jax.ShapeDtypeStruct((B, F), x.dtype),
        grid=grid,
        in_specs=[
            pl.BlockSpec((B, 1), lambda i: (0, 0)),
            pl.BlockSpec((B, tile_f), lambda i: (0, i)),
        ],
        out_specs=pl.BlockSpec((B, tile_f), lambda i: (0, i)),
        input_output_aliases=aliases,
        compiler_params=pltpu.CompilerParams(
            dimension_semantics=("parallel",),
            vmem_limit_bytes=vmem_limit),
    )(scale2, x2)
    return out.reshape(x.shape)


class DropPath:
    """Thin module-style wrapper mirroring the PyTorch `DropPath` nn.Module."""

    def __init__(self, drop_prob: float = 0.1):
        self.drop_prob = drop_prob
        self.training = True

    def __call__(self, x, *, rng_key=None, seed: int = 0):
        return drop_path(x, self.drop_prob, training=self.training,
                         rng_key=rng_key, seed=seed)


if __name__ == "__main__":
    B, C, H, W = 2, 4, 16, 16
    key = jax.random.PRNGKey(0)
    x = jax.random.normal(key, (B, C, H, W), dtype=jnp.float32)

    drop_prob = 0.25
    keep_prob = 1.0 - drop_prob

    # Training path (runs the Pallas kernel, dense per-sample tile layout).
    y = jax.block_until_ready(drop_path(x, drop_prob, training=True, seed=1234))
    assert y.shape == x.shape and y.dtype == x.dtype

    # DropPath invariant: every sample is either fully dropped (all zeros) or
    # kept and rescaled by exactly 1/keep_prob.
    xf = x.reshape(B, -1)
    yf = y.reshape(B, -1)
    for b in range(B):
        dropped = bool(jnp.all(yf[b] == 0.0))
        kept = bool(jnp.allclose(yf[b], xf[b] / keep_prob, atol=1e-5, rtol=1e-5))
        assert dropped or kept, f"sample {b} is not a valid drop-path output"

    # Deterministic given the same seed.
    y2 = jax.block_until_ready(drop_path(x, drop_prob, training=True, seed=1234))
    assert bool(jnp.array_equal(y, y2))

    # Eval mode / zero drop-prob are identity, exactly like the nn.Module.
    assert bool(jnp.array_equal(drop_path(x, drop_prob, training=False), x))
    assert bool(jnp.array_equal(drop_path(x, 0.0, training=True), x))

    print("KERNEL_OK")
</pallas_src>

<mosaic_0001>
module attributes {stable_mosaic.version = 11 : i64} {
  func.func @_drop_path_tile_kernel(%arg0: i32, %arg1: i32, %arg2: memref<2xf32, #tpu.memory_space<smem>>, %arg3: memref<1x8x128xf32, #tpu.memory_space<vmem>>, %arg4: memref<1x8x128xf32, #tpu.memory_space<vmem>>) attributes {dimension_semantics = [#tpu.dimension_semantics<parallel>, #tpu.dimension_semantics<parallel>], iteration_bounds = array<i64: 2, 1>, scalar_prefetch = 0 : i64, scratch_operands = 0 : i64, tpu.core_type = #tpu.core_type<tc>, window_params = [{transform_indices = @transform_0, window_bounds = array<i64: 2>}, {transform_indices = @transform_1, window_bounds = array<i64: 1, 8, 128>}, {transform_indices = @transform_2, window_bounds = array<i64: 1, 8, 128>}]} {
    %0 = arith.index_cast %arg0 : i32 to index
    %1 = memref.load %arg2[%0] : memref<2xf32, #tpu.memory_space<smem>>
    %c0 = arith.constant 0 : index
    %c0_0 = arith.constant 0 : index
    %c0_1 = arith.constant 0 : index
    %2 = vector.load %arg3[%c0, %c0_0, %c0_1] : memref<1x8x128xf32, #tpu.memory_space<vmem>>, vector<1x8x128xf32>
    %3 = vector.shape_cast %2 : vector<1x8x128xf32> to vector<8x128xf32>
    %4 = vector.broadcast %1 : f32 to vector<8x128xf32>
    %5 = arith.mulf %3, %4 : vector<8x128xf32>
    %c0_2 = arith.constant 0 : index
    %c0_3 = arith.constant 0 : index
    %c0_4 = arith.constant 0 : index
    %6 = vector.load %arg4[%c0_2, %c0_3, %c0_4] : memref<1x8x128xf32, #tpu.memory_space<vmem>>, vector<1x8x128xf32>
    %7 = vector.shape_cast %6 : vector<1x8x128xf32> to vector<8x128xf32>
    %8 = vector.shape_cast %5 : vector<8x128xf32> to vector<1x8x128xf32>
    tpu.vector_store %arg4[%c0_2, %c0_3, %c0_4], %8 {strides = array<i32>} : memref<1x8x128xf32, #tpu.memory_space<vmem>>, vector<1x8x128xf32>,
    return
  }
  func.func @transform_0(%arg0: i32, %arg1: i32) -> i32 {
    %c0_i32 = arith.constant 0 : i32
    %c0_i32_0 = arith.constant 0 : i32
    return %c0_i32 : i32
  }
  func.func @transform_1(%arg0: i32, %arg1: i32) -> (i32, i32, i32) {
    %c0_i32 = arith.constant 0 : i32
    %c0_i32_0 = arith.constant 0 : i32
    return %arg0, %arg1, %c0_i32 : i32, i32, i32
  }
  func.func @transform_2(%arg0: i32, %arg1: i32) -> (i32, i32, i32) {
    %c0_i32 = arith.constant 0 : i32
    %c0_i32_0 = arith.constant 0 : i32
    return %arg0, %arg1, %c0_i32 : i32, i32, i32
  }
}

</mosaic_0001>

<llo_original>
// kernel: tpu_custom_call.1
$region0: #{tpu_custom_call.1}
  #allocation0 [shape = 'u32[]', space=smem, size = 0x4, offset = 0x4, fixed_abs, tag = 'smem constant byte address 0x4 - core index']
  #allocation1 [shape = 'u32[144,128]{1,0:T(1,128)}', space=vmem, size = 0x12000, scoped, tag = 'internal scratch']
  %s0 = inlined_call_operand.hbm [shape: f32[2], index: 0, kind: input, shape index: {}]
  %s1 = inlined_call_operand.hbm [shape: f32[2,8,128], index: 1, kind: input, shape index: {}]
  %s2 = inlined_call_operand.hbm [shape: f32[2,8,128], index: 2, kind: output, shape index: {}]
  %s3 = sld [smem:[#allocation0]]
  $region49: #{tpu_custom_call.1} parent=0
    _
  %s5 = ssub.s32 1, %s3
  %s6 = scalar_select 0, %s5, %s3
  $region1: #{tpu_custom_call.1} parent=0
    #allocation2 [shape = 'u8[512]{0}', space=smem, size = 0x200, scoped, tag = 'input window, operand 0, single buffered']
    #allocation3 [shape = 's32[2]{0}', space=sflag, size = 0x8, scoped, tag = 'scoped memory for tpu_custom_call.1']
    #allocation4 [shape = 's32[2]{0}', space=sflag, size = 0x8, scoped, tag = 'scoped memory for tpu_custom_call.1']
    #allocation5 [shape = 's32[2]{0}', space=sflag, size = 0x8, scoped, tag = 'scoped memory for tpu_custom_call.1']
    #allocation6 [shape = 'u8[8192]{0}', space=vmem, size = 0x2000, scoped, tag = 'input window, operand 1']
    #allocation7 [shape = 'u8[8192]{0}', space=vmem, size = 0x2000, scoped, tag = 'output window, operand 0']
    %7 = vsyncpa [#allocation5], 0
    %8 = vsyncpa [#allocation3], 0
    %s9 = scalar_lea.sflag [#allocation3], 1
    %10 = vsyncpa %s9, 0
    %11 = vsyncpa [#allocation4], 0
    %s12 = scalar_lea.sflag [#allocation4], 1
    %13 = vsyncpa %s12, 0
    loop: start=0, step=1, limit=4
    $region2: #{tpu_custom_call.1} parent=1 // loop_pre_header
      _
    $region3: #{tpu_custom_call.1} parent=1 // loop_header
      %s15 = sphi 0, %s19
      %p16 = scmp.ge.s32.totalorder %s15, 4
      %s22 = sphi 0, %s34
      %s23 = sphi 0, %s30
      %s24 = sphi 0, %s22
      %s25 = sphi 0, %s23
      %s26 = sphi 0, %s24
      %s27 = sphi 0, %s25
      %s35 = sphi 0, %s35
      %s37 = sphi 0, %s35
      %s38 = sphi 0, %s37
      %s52 = sphi 0, %s38
      %s60 = sphi 0, %s62
      %s63 = sphi 0, %s60
      %s64 = sphi 0, %s63
      %s80 = sphi 0, %s64
      %s88 = sphi 0, %s90
      %s91 = sphi 0, %s88
      %s92 = sphi 0, %s91
      %s108 = sphi 0, %s92
    $region4: #{tpu_custom_call.1} parent=1 // loop_header_branch
      %18 = sbr.rel (%p16) target = $region8
    $region5: #{tpu_custom_call.1} parent=1 // loop_body
      %s20 = ssub.s32 %s15, 1
      %s21 = ssub.s32 %s15, 2
      %s28 = sadd.s32 1, %s23
      %p29 = scmp.ge.s32.totalorder %s28, 1
      %s30 = scalar_select %p29, 0, %s28
      %s31 = sadd.s32 1, %s22
      %s32 = scalar_select %p29, %s31, %s22
      %p33 = scmp.ge.s32.totalorder %s32, 2
      %s34 = scalar_select %p33, 0, %s32
      %s36 = sadd.s32 %s35, 1
      %p39 = scmp.eq.s32.totalorder %s15, 1
      %p40 = scmp.ne.s32.totalorder %s35, %s37
      %p41 = scmp.eq.s32.totalorder %s15, 0
      %p42 = por %p40, %p41
      %p43 = scmp.ne.s32.totalorder %s35, %s37
      %p44 = scmp.eq.s32.totalorder %s20, 1
      %p45 = por %p43, %p44
      %p46 = scmp.ne.s32.totalorder %s37, %s38
      %p47 = scmp.eq.s32.totalorder %s20, 0
      %p48 = por %p46, %p47
      %p49 = scmp.ne.s32.totalorder %s37, %s38
      %p50 = scmp.eq.s32.totalorder %s21, 1
      %p51 = por %p49, %p50
      %p53 = scmp.ne.s32.totalorder %s38, %s52
      %p54 = scmp.eq.s32.totalorder %s21, 0
      %p55 = por %p53, %p54
      %s56 = ssub.s32 %s22, %s34
      %s57 = ssub.s32 %s23, %s30
      %s58 = sor.u32 %s56, %s57
      %p59 = scmp.eq.s32.totalorder %s58, 0
      %s61 = sadd.s32 %s60, 1
      %s62 = scalar_select %p59, %s60, %s61
      %p65 = pneg %p59
      %p66 = scmp.eq.s32.totalorder %s15, 1
      %p67 = por %p65, %p66
      %p68 = scmp.ne.s32.totalorder %s60, %s63
      %p69 = scmp.eq.s32.totalorder %s15, 0
      %p70 = por %p68, %p69
      %p71 = scmp.ne.s32.totalorder %s60, %s63
      %p72 = scmp.eq.s32.totalorder %s20, 1
      %p73 = por %p71, %p72
      %p74 = scmp.ne.s32.totalorder %s63, %s64
      %p75 = scmp.eq.s32.totalorder %s20, 0
      %p76 = por %p74, %p75
      %p77 = scmp.ne.s32.totalorder %s63, %s64
      %p78 = scmp.eq.s32.totalorder %s21, 1
      %p79 = por %p77, %p78
      %p81 = scmp.ne.s32.totalorder %s64, %s80
      %p82 = scmp.eq.s32.totalorder %s21, 0
      %p83 = por %p81, %p82
      %s84 = ssub.s32 %s22, %s34
      %s85 = ssub.s32 %s23, %s30
      %s86 = sor.u32 %s84, %s85
      %p87 = scmp.eq.s32.totalorder %s86, 0
      %s89 = sadd.s32 %s88, 1
      %s90 = scalar_select %p87, %s88, %s89
      %p93 = pneg %p87
      %p94 = scmp.eq.s32.totalorder %s15, 1
      %p95 = por %p93, %p94
      %p96 = scmp.ne.s32.totalorder %s88, %s91
      %p97 = scmp.eq.s32.totalorder %s15, 0
      %p98 = por %p96, %p97
      %p99 = scmp.ne.s32.totalorder %s88, %s91
      %p100 = scmp.eq.s32.totalorder %s20, 1
      %p101 = por %p99, %p100
      %p102 = scmp.ne.s32.totalorder %s91, %s92
      %p103 = scmp.eq.s32.totalorder %s20, 0
      %p104 = por %p102, %p103
      %p105 = scmp.ne.s32.totalorder %s91, %s92
      %p106 = scmp.eq.s32.totalorder %s21, 1
      %p107 = por %p105, %p106
      %p109 = scmp.ne.s32.totalorder %s92, %s108
      %p110 = scmp.eq.s32.totalorder %s21, 0
      %p111 = por %p109, %p110
      %p112 = scmp.le.s32.totalorder 1, %s15
      %p113 = scmp.lt.s32.totalorder %s15, 3
      %p114 = pnand %p112, %p113
      %p115 = pneg %p114
      // Predicated region
      $region9: #{tpu_custom_call.1} parent=5 // pred_check
        _
      $region10: #{tpu_custom_call.1} parent=5 // pred_check_branch
        %117 = sbr.rel (%p114) target = $region12
      $region11: #{tpu_custom_call.1} parent=5 // pred_region
        %s118 = ssub.s32 %s15, 1
        // Predicated region
        $region13: #{tpu_custom_call.1} parent=11 // pred_check
          %p119 = pneg %p48
        $region14: #{tpu_custom_call.1} parent=11 // pred_check_branch
          %121 = sbr.rel (%p119) target = $region16
        $region15: #{tpu_custom_call.1} parent=11 // pred_region
          %s123 = ssub.s32 16, 16
          %124 = vsyncadd [#allocation5], %s123
          %127 = dma.hbm_to_smem %s0, 16, [#allocation2], [#allocation5]
        $region16: #{tpu_custom_call.1} parent=11 // pred_fallthru
          _
      $region12: #{tpu_custom_call.1} parent=5 // pred_fallthru
        _
      %p128 = scmp.lt.s32.totalorder %s15, 2
      // Predicated region
      $region17: #{tpu_custom_call.1} parent=5 // pred_check
        %p129 = pneg %p128
      $region18: #{tpu_custom_call.1} parent=5 // pred_check_branch
        %131 = sbr.rel (%p129) target = $region20
      $region19: #{tpu_custom_call.1} parent=5 // pred_region
        // Predicated region
        $region21: #{tpu_custom_call.1} parent=19 // pred_check
          %p132 = pneg %p70
        $region22: #{tpu_custom_call.1} parent=19 // pred_check_branch
          %134 = sbr.rel (%p132) target = $region24
        $region23: #{tpu_custom_call.1} parent=19 // pred_region
          %s135 = sand.u32 %s60, 1
          %s136 = scalar_lea.sflag [#allocation3], %s135
          %s137 = sand.u32 %s60, 1
          %s138 = smul.addr %s137, 8
          %s139 = scalar_lea.vmem [#allocation6], %s138
          %s141 = ssub.s32 128, 128
          %142 = vsyncadd %s136, %s141
          %s143 = sadd.s32 %s23, %s22
          %s144 = smul.addr %s143, 128
          %s145 = scalar_lea.hbm %s1, %s144
          %s147 = sshll.u32 %s139, 4
          %s148 = int_to_ptr.vmem [resolvable:$true] %s147
          %150 = dma.hbm_to_vmem [thread:$0]  %s145, 128, %s148, %s136
        $region24: #{tpu_custom_call.1} parent=19 // pred_fallthru
          _
      $region20: #{tpu_custom_call.1} parent=5 // pred_fallthru
        _
      %p151 = scmp.le.s32.totalorder 1, %s15
      %p152 = scmp.lt.s32.totalorder %s15, 3
      %p153 = pnand %p151, %p152
      %p154 = pneg %p153
      // Predicated region
      $region25: #{tpu_custom_call.1} parent=5 // pred_check
        _
      $region26: #{tpu_custom_call.1} parent=5 // pred_check_branch
        %156 = sbr.rel (%p153) target = $region28
      $region27: #{tpu_custom_call.1} parent=5 // pred_region
        %s157 = ssub.s32 %s15, 1
        // Predicated region
        $region29: #{tpu_custom_call.1} parent=27 // pred_check
          %p158 = pneg %p48
        $region30: #{tpu_custom_call.1} parent=27 // pred_check_branch
          %160 = sbr.rel (%p158) target = $region32
        $region31: #{tpu_custom_call.1} parent=27 // pred_region
          %161 = dma.done [#allocation5], 16
        $region32: #{tpu_custom_call.1} parent=27 // pred_fallthru
          _
        %s162 = sand.u32 %s63, 1
        %s163 = scalar_lea.sflag [#allocation3], %s162
        %s164 = sand.u32 %s63, 1
        %s165 = smul.addr %s164, 8
        %s166 = scalar_lea.vmem [#allocation6], %s165
        // Predicated region
        $region33: #{tpu_custom_call.1} parent=27 // pred_check
          %p167 = pneg %p76
        $region34: #{tpu_custom_call.1} parent=27 // pred_check_branch
          %169 = sbr.rel (%p167) target = $region36
        $region35: #{tpu_custom_call.1} parent=27 // pred_region
          %170 = dma.done %s163, 128
        $region36: #{tpu_custom_call.1} parent=27 // pred_fallthru
          _
        %171 = sfence
        %p172 = pneg %p48
        %p173 = pneg %p45
        %s174 = sand.u32 %s63, 1
        %s175 = scalar_lea.sflag [#allocation3], %s174
        %s176 = sand.u32 %s63, 1
        %s177 = smul.addr %s176, 8
        %s178 = scalar_lea.vmem [#allocation6], %s177
        %p179 = pneg %p76
        %p180 = pneg %p73
        %p181 = pneg %p104
        %p182 = pneg %p101
        %s183 = sand.u32 %s91, 1
        %s184 = scalar_lea.sflag [#allocation4], %s183
        %s185 = sand.u32 %s91, 1
        %s186 = smul.addr %s185, 8
        %s187 = scalar_lea.vmem [#allocation7], %s186
        %s188 = sld [smem:[#allocation2 + %s24]]
        %v189 = vld [vmem:[%s166] sm:$0xff]
        %v190 = vstv %s188
        %v191 = vmul.f32 %v189, %v190
        %192 = vst [vmem:[%s187] sm:$0xff] %v191
        %s193 = sand.u32 %s91, 1
        %s194 = scalar_lea.sflag [#allocation4], %s193
        %s195 = sand.u32 %s91, 1
        %s196 = smul.addr %s195, 8
        %s197 = scalar_lea.vmem [#allocation7], %s196
        // Predicated region
        $region37: #{tpu_custom_call.1} parent=27 // pred_check
          %p198 = pneg %p101
        $region38: #{tpu_custom_call.1} parent=27 // pred_check_branch
          %200 = sbr.rel (%p198) target = $region40
        $region39: #{tpu_custom_call.1} parent=27 // pred_region
          %s202 = ssub.s32 128, 128
          %203 = vsyncadd %s194, %s202
          %s204 = sadd.s32 %s25, %s24
          %s205 = smul.addr %s204, 128
          %s206 = scalar_lea.hbm %s2, %s205
          %s208 = sshll.u32 %s197, 4
          %s209 = int_to_ptr.vmem [resolvable:$true] %s208
          %211 = dma.vmem_to_hbm [thread:$0]  %s209, 128, %s206, %s194
        $region40: #{tpu_custom_call.1} parent=27 // pred_fallthru
          _
      $region28: #{tpu_custom_call.1} parent=5 // pred_fallthru
        _
      %p212 = scmp.le.s32.totalorder 2, %s15
      // Predicated region
      $region41: #{tpu_custom_call.1} parent=5 // pred_check
        %p213 = pneg %p212
      $region42: #{tpu_custom_call.1} parent=5 // pred_check_branch
        %215 = sbr.rel (%p213) target = $region44
      $region43: #{tpu_custom_call.1} parent=5 // pred_region
        %s216 = ssub.s32 %s15, 2
        // Predicated region
        $region45: #{tpu_custom_call.1} parent=43 // pred_check
          %p217 = pneg %p107
        $region46: #{tpu_custom_call.1} parent=43 // pred_check_branch
          %219 = sbr.rel (%p217) target = $region48
        $region47: #{tpu_custom_call.1} parent=43 // pred_region
          %s220 = sand.u32 %s92, 1
          %s221 = scalar_lea.sflag [#allocation4], %s220
          %s222 = sand.u32 %s92, 1
          %s223 = smul.addr %s222, 8
          %s224 = scalar_lea.vmem [#allocation7], %s223
          %225 = dma.done %s221, 128
        $region48: #{tpu_custom_call.1} parent=43 // pred_fallthru
          _
      $region44: #{tpu_custom_call.1} parent=5 // pred_fallthru
        _
    $region6: #{tpu_custom_call.1} parent=1 // loop_footer
      %s19 = sadd.s32 1, %s15
    $region7: #{tpu_custom_call.1} parent=1 // loop_footer_branch
      %14 = sbr.rel target = $region3
    $region8: #{tpu_custom_call.1} parent=1 // loop_exit
      _
    %226 = vsyncpa [#allocation3], 1
    %s227 = scalar_lea.sflag [#allocation3], 1
    %228 = vsyncpa %s227, 1
    %229 = vsyncpa [#allocation4], 1
    %s230 = scalar_lea.sflag [#allocation4], 1
    %231 = vsyncpa %s230, 1
    %232 = vsyncpa [#allocation5], 1
    %s233 = scalar_lea.sflag [#allocation5], 1
    %234 = vsyncpa %s233, 1

</llo_original>
